<compile_context>
chip_gen: v7x
topology: tpu7x:2x2x1
jax: 0.10.0
libtpu: 0.0.40
codegen_flags: <defaults>
</compile_context>

<pallas_src>
import math

import jax
import jax.numpy as jnp
from jax import lax
from jax.experimental import pallas as pl
from jax.experimental.pallas import tpu as pltpu


# ----------------------------------------------------------------------------
# Relative-position bucket / bias (one-time glue, plain JAX — mirrors PyTorch).
# ----------------------------------------------------------------------------
def relative_position_bucket(relative_position, bidirectional=True,
                             num_buckets=32, max_distance=128):
    ret = jnp.zeros_like(relative_position)
    n = -relative_position
    if bidirectional:
        num_buckets //= 2
        ret = ret + (n < 0).astype(jnp.int32) * num_buckets
        n = jnp.abs(n)
    else:
        n = jnp.maximum(n, jnp.zeros_like(n))
    max_exact = num_buckets // 2
    is_small = n < max_exact
    # torch .long() truncates toward zero; the log term is >= 0 where selected -> floor exact.
    val_if_large = max_exact + jnp.floor(
        jnp.log(n.astype(jnp.float32) / max_exact)
        / math.log(max_distance / max_exact)
        * (num_buckets - max_exact)
    ).astype(jnp.int32)
    val_if_large = jnp.minimum(val_if_large,
                               jnp.full_like(val_if_large, num_buckets - 1))
    ret = ret + jnp.where(is_small, n, val_if_large)
    return ret


def get_relative_position_bias(seq_len, rel_emb, bidirectional=True,
                               num_buckets=32, max_distance=128):
    """Builds the bias directly in (H, S, S) layout (no (S,S,H)->(H,S,S) transpose)."""
    ctx = jnp.arange(seq_len, dtype=jnp.int32)[:, None]
    mem = jnp.arange(seq_len, dtype=jnp.int32)[None, :]
    buckets = relative_position_bucket(mem - ctx, bidirectional,
                                       num_buckets, max_distance)        # (S, S)
    rel_emb_t = jnp.transpose(rel_emb)                                    # (H, NB) — tiny
    return jnp.take(rel_emb_t, buckets, axis=1)                           # (H, S, S)


# ----------------------------------------------------------------------------
# One-time parameter packing (hoisted out of the hot path).
# ----------------------------------------------------------------------------
def pack_params(wq, wk, wv, wfc, rel_emb, seq_len, n_heads, *,
                bidirectional=True, num_buckets=32, max_distance=128,
                compute_dtype=jnp.bfloat16):
    """wq/wk/wv/wfc: PyTorch nn.Linear weights, shape (out, in) = (D, D).
    Returns:
      wqkv  : (D, 3*D)   [Wq.T * 1/sqrt(dk) | Wk.T | Wv.T]    (compute dtype)
      wfc_t : (D, D)     Wfc.T                                (compute dtype)
      bias  : (H, S, S)  relative-position bias (bf16 when compute dtype is bf16, else f32)
    """
    D = wq.shape[0]
    dk = D // n_heads
    scale = 1.0 / math.sqrt(dk)
    # y = x @ W.T for nn.Linear, so store the transposed weights; fold the score scale
    # into the Q projection columns.
    wqkv = jnp.concatenate(
        [jnp.transpose(wq) * scale, jnp.transpose(wk), jnp.transpose(wv)],
        axis=-1).astype(compute_dtype)                                    # (D, 3D)
    wfc_t = jnp.transpose(wfc).astype(compute_dtype)                      # (D, D)
    bias_dtype = (jnp.bfloat16 if jnp.dtype(compute_dtype) == jnp.dtype(jnp.bfloat16)
                  else jnp.float32)
    bias = get_relative_position_bias(seq_len, rel_emb, bidirectional,
                                      num_buckets, max_distance).astype(bias_dtype)
    return wqkv, wfc_t, bias


# ----------------------------------------------------------------------------
# Pallas kernel: one batch element per grid step, static head loop inside.
# ----------------------------------------------------------------------------
def _make_mhra_kernel(n_heads, exact_recip):
    def kernel(x_ref, wqkv_ref, wfc_ref, bias_ref, out_ref):
        # x_ref:    (1, S, D)    compute dtype (bf16 or f32)
        # wqkv_ref: (D, 3D)      resident fused QKV weights (Q pre-scaled by 1/sqrt(dk))
        # wfc_ref:  (D, D)       resident output-projection weights (transposed)
        # bias_ref: (H, S, S)    resident relative-position bias (bf16 or f32)
        # out_ref:  (1, S, D)
        cdt = x_ref.dtype
        D = x_ref.shape[-1]
        dk = D // n_heads

        x = x_ref[0]                                                       # (S, D)
        # One lane-dense fused projection for ALL heads: (S, 3D), single MXU matmul.
        qkv = jnp.dot(x, wqkv_ref[...])                                    # compute dtype

        head_outs = []
        for h in range(n_heads):                                           # static, unrolled
            q = qkv[:, h * dk:(h + 1) * dk]                                # static lane slices
            k = qkv[:, D + h * dk:D + (h + 1) * dk]
            v = qkv[:, 2 * D + h * dk:2 * D + (h + 1) * dk]

            # scores = (q / sqrt(dk)) @ k.T  (scale folded into Q weights), f32 accumulate.
            s = lax.dot_general(q, k, (((1,), (1,)), ((), ())),
                                preferred_element_type=jnp.float32)        # (S, S) f32
            s = s + bias_ref[h].astype(jnp.float32)

            # Softmax in f32 (VPU/EUP); probabilities cast down only for the MXU matmul.
            m = jnp.max(s, axis=-1, keepdims=True)
            p = jnp.exp(s - m)
            l = jnp.sum(p, axis=-1, keepdims=True)
            o = jnp.dot(p.astype(cdt), v,
                        preferred_element_type=jnp.float32)                # (S, dk) f32
            if exact_recip:
                o = o / l
            else:
                o = o * pl.reciprocal(l, approx=True)                      # EUP slot, ~free
            head_outs.append(o.astype(cdt))

        # Head outputs concatenated along lanes == transpose(1,2).reshape(S, D).
        attn = jnp.concatenate(head_outs, axis=-1)                         # (S, D)
        # ONE full-depth (K = D) output projection against the resident Wfc.
        out = jnp.dot(attn, wfc_ref[...], preferred_element_type=jnp.float32)
        out_ref[0] = out.astype(out_ref.dtype)

    return kernel


def _vmem_capacity_bytes(default=64 << 20):
    try:
        return int(pltpu.get_tpu_info().vmem_capacity_bytes)
    except Exception:
        return int(default)


def multi_head_relative_attention(x, wqkv, wfc_t, bias, *,
                                  compute_dtype=jnp.bfloat16):
    """x: (B, S, D). wqkv: (D, 3D), wfc_t: (D, D), bias: (H, S, S) (from pack_params).
    Returns (B, S, D) in x.dtype."""
    B, S, D = x.shape
    H = bias.shape[0]
    x_c = x.astype(compute_dtype)

    kernel = _make_mhra_kernel(
        H, exact_recip=(jnp.dtype(compute_dtype) == jnp.dtype(jnp.float32)))

    # Explicit VMEM budget from the per-step footprint, capped at ~70% of capacity.
    csz = jnp.dtype(compute_dtype).itemsize
    bsz = jnp.dtype(bias.dtype).itemsize
    osz = jnp.dtype(x.dtype).itemsize
    blocks = (2 * S * D * csz            # x (double-buffered block)
              + 2 * S * D * osz          # out (double-buffered block)
              + 2 * 3 * D * D * csz      # resident fused QKV weights
              + 2 * D * D * csz          # resident fc weights
              + 2 * H * S * S * bsz)     # resident bias
    inter = S * 3 * D * csz + 4 * S * S * 4 + 2 * S * D * 4
    vmem_limit = int(min(max(blocks + inter + (4 << 20), 16 << 20),
                         int(0.7 * _vmem_capacity_bytes())))

    return pl.pallas_call(
        kernel,
        out_shape=jax.ShapeDtypeStruct((B, S, D), x.dtype),
        grid_spec=pltpu.PrefetchScalarGridSpec(
            num_scalar_prefetch=0,
            grid=(B,),
            in_specs=[
                pl.BlockSpec((1, S, D), lambda b: (b, 0, 0)),         # x, per batch
                pl.BlockSpec((D, 3 * D), lambda b: (0, 0)),           # fused QKV weights (resident)
                pl.BlockSpec((D, D), lambda b: (0, 0)),               # fc weights (resident)
                pl.BlockSpec((H, S, S), lambda b: (0, 0, 0)),         # bias (resident)
            ],
            out_specs=pl.BlockSpec((1, S, D), lambda b: (b, 0, 0)),
        ),
        compiler_params=pltpu.CompilerParams(
            dimension_semantics=("parallel",),
            vmem_limit_bytes=vmem_limit),
    )(x_c, wqkv, wfc_t, bias)


# ----------------------------------------------------------------------------
# Pure-JAX reference (mirrors the PyTorch forward) for a sanity check.
# ----------------------------------------------------------------------------
def reference_forward(x, wq, wk, wv, wfc, rel_emb, n_heads,
                      bidirectional=True, num_buckets=32, max_distance=128):
    B, S, D = x.shape
    dk = D // n_heads
    q = (x @ wq.T).reshape(B, S, n_heads, dk).transpose(0, 2, 1, 3)
    k = (x @ wk.T).reshape(B, S, n_heads, dk).transpose(0, 2, 1, 3)
    v = (x @ wv.T).reshape(B, S, n_heads, dk).transpose(0, 2, 1, 3)
    scores = jnp.einsum('bhqd,bhkd->bhqk', q, k) / math.sqrt(dk)
    bias = get_relative_position_bias(S, rel_emb, bidirectional,
                                      num_buckets, max_distance).astype(jnp.float32)
    scores = scores + bias[None]
    attn = jax.nn.softmax(scores, axis=-1)
    out = jnp.einsum('bhqk,bhkd->bhqd', attn, v)
    out = out.transpose(0, 2, 1, 3).reshape(B, S, D)
    return out @ wfc.T


if __name__ == "__main__":
    # Small shapes consistent with the module.
    B, S, D, H = 2, 8, 32, 4
    NUM_BUCKETS, MAX_DIST = 32, 128

    key = jax.random.PRNGKey(0)
    kx, kq, kk, kv, kf, ke = jax.random.split(key, 6)

    x = jax.random.normal(kx, (B, S, D), dtype=jnp.float32)
    # PyTorch nn.Linear weight layout: (out_features, in_features).
    w_scale = 1.0 / math.sqrt(D)
    wq = jax.random.normal(kq, (D, D), dtype=jnp.float32) * w_scale
    wk = jax.random.normal(kk, (D, D), dtype=jnp.float32) * w_scale
    wv = jax.random.normal(kv, (D, D), dtype=jnp.float32) * w_scale
    wfc = jax.random.normal(kf, (D, D), dtype=jnp.float32) * w_scale
    # nn.Embedding(attention_num_buckets, n_heads)
    rel_emb = jax.random.normal(ke, (NUM_BUCKETS, H), dtype=jnp.float32) * 0.1

    ref = jax.block_until_ready(reference_forward(
        x, wq, wk, wv, wfc, rel_emb, n_heads=H,
        bidirectional=True, num_buckets=NUM_BUCKETS, max_distance=MAX_DIST))

    # f32 compute path: structural-correctness check of the kernel.
    wqkv32, wfc32, bias32 = pack_params(
        wq, wk, wv, wfc, rel_emb, S, H,
        bidirectional=True, num_buckets=NUM_BUCKETS, max_distance=MAX_DIST,
        compute_dtype=jnp.float32)
    out32 = jax.block_until_ready(
        multi_head_relative_attention(x, wqkv32, wfc32, bias32,
                                      compute_dtype=jnp.float32))
    assert out32.shape == (B, S, D)
    assert jnp.allclose(out32, ref, atol=1e-2, rtol=1e-2), "f32 path mismatch vs reference"

    # bf16 MXU operands with f32 accumulation + bf16 bias: the performance configuration.
    wqkv16, wfc16, bias16 = pack_params(
        wq, wk, wv, wfc, rel_emb, S, H,
        bidirectional=True, num_buckets=NUM_BUCKETS, max_distance=MAX_DIST,
        compute_dtype=jnp.bfloat16)
    out16 = jax.block_until_ready(
        multi_head_relative_attention(x, wqkv16, wfc16, bias16,
                                      compute_dtype=jnp.bfloat16))
    assert out16.shape == (B, S, D)
    assert jnp.allclose(out16, ref, atol=1e-1, rtol=1e-1), "bf16 path mismatch vs reference"

    print("KERNEL_OK")
</pallas_src>

<mosaic_0001>
module attributes {stable_mosaic.version = 11 : i64} {
  func.func @kernel(%arg0: i32, %arg1: memref<1x8x32xf32, #tpu.memory_space<vmem>>, %arg2: memref<32x96xf32, #tpu.memory_space<vmem>>, %arg3: memref<32x32xf32, #tpu.memory_space<vmem>>, %arg4: memref<4x8x8xf32, #tpu.memory_space<vmem>>, %arg5: memref<1x8x32xf32, #tpu.memory_space<vmem>>) attributes {dimension_semantics = [#tpu.dimension_semantics<parallel>], iteration_bounds = array<i64: 2>, scalar_prefetch = 0 : i64, scratch_operands = 0 : i64, tpu.core_type = #tpu.core_type<tc>, window_params = [{transform_indices = @transform_0, window_bounds = array<i64: 1, 8, 32>}, {pipeline_mode = #tpu.pipeline_mode<synchronous>, transform_indices = @transform_1, window_bounds = array<i64: 32, 96>}, {pipeline_mode = #tpu.pipeline_mode<synchronous>, transform_indices = @transform_2, window_bounds = array<i64: 32, 32>}, {pipeline_mode = #tpu.pipeline_mode<synchronous>, transform_indices = @transform_3, window_bounds = array<i64: 4, 8, 8>}, {transform_indices = @transform_4, window_bounds = array<i64: 1, 8, 32>}]} {
    %c0 = arith.constant 0 : index
    %c0_0 = arith.constant 0 : index
    %c0_1 = arith.constant 0 : index
    %0 = vector.load %arg1[%c0, %c0_0, %c0_1] : memref<1x8x32xf32, #tpu.memory_space<vmem>>, vector<1x8x32xf32>
    %1 = vector.shape_cast %0 : vector<1x8x32xf32> to vector<8x32xf32>
    %c0_2 = arith.constant 0 : index
    %c0_3 = arith.constant 0 : index
    %2 = vector.load %arg2[%c0_2, %c0_3] : memref<32x96xf32, #tpu.memory_space<vmem>>, vector<32x96xf32>
    %cst = arith.constant dense<0.000000e+00> : vector<8x96xf32>
    %3 = tpu.matmul %1, %2, %cst {dimension_numbers = #tpu.dot_dimension_numbers<[1], [0], [0], [1], [0, 0, 1, 1], [], []>} : vector<8x32xf32>, vector<32x96xf32>, vector<8x96xf32> -> vector<8x96xf32>
    %4 = vector.extract_strided_slice %3 {offsets = [0, 0], sizes = [8, 8], strides = [1, 1]} : vector<8x96xf32> to vector<8x8xf32>
    %5 = vector.extract_strided_slice %3 {offsets = [0, 32], sizes = [8, 8], strides = [1, 1]} : vector<8x96xf32> to vector<8x8xf32>
    %6 = vector.extract_strided_slice %3 {offsets = [0, 64], sizes = [8, 8], strides = [1, 1]} : vector<8x96xf32> to vector<8x8xf32>
    %cst_4 = arith.constant dense<0.000000e+00> : vector<8x8xf32>
    %7 = tpu.matmul %4, %5, %cst_4 {dimension_numbers = #tpu.dot_dimension_numbers<[1], [1], [0], [0], [0, 0, 1, 0], [], []>} : vector<8x8xf32>, vector<8x8xf32>, vector<8x8xf32> -> vector<8x8xf32>
    %c0_5 = arith.constant 0 : index
    %c0_6 = arith.constant 0 : index
    %c0_7 = arith.constant 0 : index
    %8 = vector.load %arg4[%c0_5, %c0_6, %c0_7] : memref<4x8x8xf32, #tpu.memory_space<vmem>>, vector<1x8x8xf32>
    %9 = vector.shape_cast %8 : vector<1x8x8xf32> to vector<8x8xf32>
    %10 = arith.addf %7, %9 : vector<8x8xf32>
    %cst_8 = arith.constant dense<0xFF800000> : vector<8xf32>
    %11 = vector.multi_reduction <maximumf>, %10, %cst_8 [1] : vector<8x8xf32> to vector<8xf32>
    %12 = vector.shape_cast %11 : vector<8xf32> to vector<8x1xf32>
    %13 = vector.broadcast %12 : vector<8x1xf32> to vector<8x8xf32>
    %14 = arith.subf %10, %13 : vector<8x8xf32>
    %15 = math.exp %14 : vector<8x8xf32>
    %cst_9 = arith.constant dense<0.000000e+00> : vector<8xf32>
    %16 = vector.multi_reduction <add>, %15, %cst_9 [1] : vector<8x8xf32> to vector<8xf32>
    %17 = vector.shape_cast %16 : vector<8xf32> to vector<8x1xf32>
    %cst_10 = arith.constant dense<0.000000e+00> : vector<8x8xf32>
    %18 = tpu.matmul %15, %6, %cst_10 {dimension_numbers = #tpu.dot_dimension_numbers<[1], [0], [0], [1], [0, 0, 1, 1], [], []>} : vector<8x8xf32>, vector<8x8xf32>, vector<8x8xf32> -> vector<8x8xf32>
    %19 = vector.broadcast %17 : vector<8x1xf32> to vector<8x8xf32>
    %20 = arith.divf %18, %19 : vector<8x8xf32>
    %21 = vector.extract_strided_slice %3 {offsets = [0, 8], sizes = [8, 8], strides = [1, 1]} : vector<8x96xf32> to vector<8x8xf32>
    %22 = vector.extract_strided_slice %3 {offsets = [0, 40], sizes = [8, 8], strides = [1, 1]} : vector<8x96xf32> to vector<8x8xf32>
    %23 = vector.extract_strided_slice %3 {offsets = [0, 72], sizes = [8, 8], strides = [1, 1]} : vector<8x96xf32> to vector<8x8xf32>
    %cst_11 = arith.constant dense<0.000000e+00> : vector<8x8xf32>
    %24 = tpu.matmul %21, %22, %cst_11 {dimension_numbers = #tpu.dot_dimension_numbers<[1], [1], [0], [0], [0, 0, 1, 0], [], []>} : vector<8x8xf32>, vector<8x8xf32>, vector<8x8xf32> -> vector<8x8xf32>
    %c1 = arith.constant 1 : index
    %c0_12 = arith.constant 0 : index
    %c0_13 = arith.constant 0 : index
    %25 = vector.load %arg4[%c1, %c0_12, %c0_13] : memref<4x8x8xf32, #tpu.memory_space<vmem>>, vector<1x8x8xf32>
    %26 = vector.shape_cast %25 : vector<1x8x8xf32> to vector<8x8xf32>
    %27 = arith.addf %24, %26 : vector<8x8xf32>
    %cst_14 = arith.constant dense<0xFF800000> : vector<8xf32>
    %28 = vector.multi_reduction <maximumf>, %27, %cst_14 [1] : vector<8x8xf32> to vector<8xf32>
    %29 = vector.shape_cast %28 : vector<8xf32> to vector<8x1xf32>
    %30 = vector.broadcast %29 : vector<8x1xf32> to vector<8x8xf32>
    %31 = arith.subf %27, %30 : vector<8x8xf32>
    %32 = math.exp %31 : vector<8x8xf32>
    %cst_15 = arith.constant dense<0.000000e+00> : vector<8xf32>
    %33 = vector.multi_reduction <add>, %32, %cst_15 [1] : vector<8x8xf32> to vector<8xf32>
    %34 = vector.shape_cast %33 : vector<8xf32> to vector<8x1xf32>
    %cst_16 = arith.constant dense<0.000000e+00> : vector<8x8xf32>
    %35 = tpu.matmul %32, %23, %cst_16 {dimension_numbers = #tpu.dot_dimension_numbers<[1], [0], [0], [1], [0, 0, 1, 1], [], []>} : vector<8x8xf32>, vector<8x8xf32>, vector<8x8xf32> -> vector<8x8xf32>
    %36 = vector.broadcast %34 : vector<8x1xf32> to vector<8x8xf32>
    %37 = arith.divf %35, %36 : vector<8x8xf32>
    %38 = vector.extract_strided_slice %3 {offsets = [0, 16], sizes = [8, 8], strides = [1, 1]} : vector<8x96xf32> to vector<8x8xf32>
    %39 = vector.extract_strided_slice %3 {offsets = [0, 48], sizes = [8, 8], strides = [1, 1]} : vector<8x96xf32> to vector<8x8xf32>
    %40 = vector.extract_strided_slice %3 {offsets = [0, 80], sizes = [8, 8], strides = [1, 1]} : vector<8x96xf32> to vector<8x8xf32>
    %cst_17 = arith.constant dense<0.000000e+00> : vector<8x8xf32>
    %41 = tpu.matmul %38, %39, %cst_17 {dimension_numbers = #tpu.dot_dimension_numbers<[1], [1], [0], [0], [0, 0, 1, 0], [], []>} : vector<8x8xf32>, vector<8x8xf32>, vector<8x8xf32> -> vector<8x8xf32>
    %c2 = arith.constant 2 : index
    %c0_18 = arith.constant 0 : index
    %c0_19 = arith.constant 0 : index
    %42 = vector.load %arg4[%c2, %c0_18, %c0_19] : memref<4x8x8xf32, #tpu.memory_space<vmem>>, vector<1x8x8xf32>
    %43 = vector.shape_cast %42 : vector<1x8x8xf32> to vector<8x8xf32>
    %44 = arith.addf %41, %43 : vector<8x8xf32>
    %cst_20 = arith.constant dense<0xFF800000> : vector<8xf32>
    %45 = vector.multi_reduction <maximumf>, %44, %cst_20 [1] : vector<8x8xf32> to vector<8xf32>
    %46 = vector.shape_cast %45 : vector<8xf32> to vector<8x1xf32>
    %47 = vector.broadcast %46 : vector<8x1xf32> to vector<8x8xf32>
    %48 = arith.subf %44, %47 : vector<8x8xf32>
    %49 = math.exp %48 : vector<8x8xf32>
    %cst_21 = arith.constant dense<0.000000e+00> : vector<8xf32>
    %50 = vector.multi_reduction <add>, %49, %cst_21 [1] : vector<8x8xf32> to vector<8xf32>
    %51 = vector.shape_cast %50 : vector<8xf32> to vector<8x1xf32>
    %cst_22 = arith.constant dense<0.000000e+00> : vector<8x8xf32>
    %52 = tpu.matmul %49, %40, %cst_22 {dimension_numbers = #tpu.dot_dimension_numbers<[1], [0], [0], [1], [0, 0, 1, 1], [], []>} : vector<8x8xf32>, vector<8x8xf32>, vector<8x8xf32> -> vector<8x8xf32>
    %53 = vector.broadcast %51 : vector<8x1xf32> to vector<8x8xf32>
    %54 = arith.divf %52, %53 : vector<8x8xf32>
    %55 = vector.extract_strided_slice %3 {offsets = [0, 24], sizes = [8, 8], strides = [1, 1]} : vector<8x96xf32> to vector<8x8xf32>
    %56 = vector.extract_strided_slice %3 {offsets = [0, 56], sizes = [8, 8], strides = [1, 1]} : vector<8x96xf32> to vector<8x8xf32>
    %57 = vector.extract_strided_slice %3 {offsets = [0, 88], sizes = [8, 8], strides = [1, 1]} : vector<8x96xf32> to vector<8x8xf32>
    %cst_23 = arith.constant dense<0.000000e+00> : vector<8x8xf32>
    %58 = tpu.matmul %55, %56, %cst_23 {dimension_numbers = #tpu.dot_dimension_numbers<[1], [1], [0], [0], [0, 0, 1, 0], [], []>} : vector<8x8xf32>, vector<8x8xf32>, vector<8x8xf32> -> vector<8x8xf32>
    %c3 = arith.constant 3 : index
    %c0_24 = arith.constant 0 : index
    %c0_25 = arith.constant 0 : index
    %59 = vector.load %arg4[%c3, %c0_24, %c0_25] : memref<4x8x8xf32, #tpu.memory_space<vmem>>, vector<1x8x8xf32>
    %60 = vector.shape_cast %59 : vector<1x8x8xf32> to vector<8x8xf32>
    %61 = arith.addf %58, %60 : vector<8x8xf32>
    %cst_26 = arith.constant dense<0xFF800000> : vector<8xf32>
    %62 = vector.multi_reduction <maximumf>, %61, %cst_26 [1] : vector<8x8xf32> to vector<8xf32>
    %63 = vector.shape_cast %62 : vector<8xf32> to vector<8x1xf32>
    %64 = vector.broadcast %63 : vector<8x1xf32> to vector<8x8xf32>
    %65 = arith.subf %61, %64 : vector<8x8xf32>
    %66 = math.exp %65 : vector<8x8xf32>
    %cst_27 = arith.constant dense<0.000000e+00> : vector<8xf32>
    %67 = vector.multi_reduction <add>, %66, %cst_27 [1] : vector<8x8xf32> to vector<8xf32>
    %68 = vector.shape_cast %67 : vector<8xf32> to vector<8x1xf32>
    %cst_28 = arith.constant dense<0.000000e+00> : vector<8x8xf32>
    %69 = tpu.matmul %66, %57, %cst_28 {dimension_numbers = #tpu.dot_dimension_numbers<[1], [0], [0], [1], [0, 0, 1, 1], [], []>} : vector<8x8xf32>, vector<8x8xf32>, vector<8x8xf32> -> vector<8x8xf32>
    %70 = vector.broadcast %68 : vector<8x1xf32> to vector<8x8xf32>
    %71 = arith.divf %69, %70 : vector<8x8xf32>
    %72 = tpu.concatenate %20, %37, %54, %71 in 1 : vector<8x8xf32>, vector<8x8xf32>, vector<8x8xf32>, vector<8x8xf32> -> vector<8x32xf32>
    %c0_29 = arith.constant 0 : index
    %c0_30 = arith.constant 0 : index
    %73 = vector.load %arg3[%c0_29, %c0_30] : memref<32x32xf32, #tpu.memory_space<vmem>>, vector<32x32xf32>
    %cst_31 = arith.constant dense<0.000000e+00> : vector<8x32xf32>
    %74 = tpu.matmul %72, %73, %cst_31 {dimension_numbers = #tpu.dot_dimension_numbers<[1], [0], [0], [1], [0, 0, 1, 1], [], []>} : vector<8x32xf32>, vector<32x32xf32>, vector<8x32xf32> -> vector<8x32xf32>
    %c0_32 = arith.constant 0 : index
    %c0_33 = arith.constant 0 : index
    %c0_34 = arith.constant 0 : index
    %75 = vector.load %arg5[%c0_32, %c0_33, %c0_34] : memref<1x8x32xf32, #tpu.memory_space<vmem>>, vector<1x8x32xf32>
    %76 = vector.shape_cast %75 : vector<1x8x32xf32> to vector<8x32xf32>
    %77 = vector.shape_cast %74 : vector<8x32xf32> to vector<1x8x32xf32>
    tpu.vector_store %arg5[%c0_32, %c0_33, %c0_34], %77 {strides = array<i32>} : memref<1x8x32xf32, #tpu.memory_space<vmem>>, vector<1x8x32xf32>,
    return
  }
  func.func @transform_0(%arg0: i32) -> (i32, i32, i32) {
    %c0_i32 = arith.constant 0 : i32
    %c0_i32_0 = arith.constant 0 : i32
    %c0_i32_1 = arith.constant 0 : i32
    return %arg0, %c0_i32, %c0_i32_0 : i32, i32, i32
  }
  func.func @transform_1(%arg0: i32) -> (i32, i32) {
    %c0_i32 = arith.constant 0 : i32
    %c0_i32_0 = arith.constant 0 : i32
    %c0_i32_1 = arith.constant 0 : i32
    return %c0_i32, %c0_i32_0 : i32, i32
  }
  func.func @transform_2(%arg0: i32) -> (i32, i32) {
    %c0_i32 = arith.constant 0 : i32
    %c0_i32_0 = arith.constant 0 : i32
    %c0_i32_1 = arith.constant 0 : i32
    return %c0_i32, %c0_i32_0 : i32, i32
  }
  func.func @transform_3(%arg0: i32) -> (i32, i32, i32) {
    %c0_i32 = arith.constant 0 : i32
    %c0_i32_0 = arith.constant 0 : i32
    %c0_i32_1 = arith.constant 0 : i32
    %c0_i32_2 = arith.constant 0 : i32
    return %c0_i32, %c0_i32_0, %c0_i32_1 : i32, i32, i32
  }
  func.func @transform_4(%arg0: i32) -> (i32, i32, i32) {
    %c0_i32 = arith.constant 0 : i32
    %c0_i32_0 = arith.constant 0 : i32
    %c0_i32_1 = arith.constant 0 : i32
    return %arg0, %c0_i32, %c0_i32_0 : i32, i32, i32
  }
}

</mosaic_0001>

<llo_original>
// kernel: tpu_custom_call.1
$region0: #{tpu_custom_call.1}
  #allocation0 [shape = 'u32[]', space=smem, size = 0x4, offset = 0x4, fixed_abs, tag = 'smem constant byte address 0x4 - core index']
  #allocation1 [shape = 'u32[144,128]{1,0:T(1,128)}', space=vmem, size = 0x12000, scoped, tag = 'internal scratch']
  %s0 = inlined_call_operand.hbm [shape: f32[2,8,32], index: 0, kind: input, shape index: {}]
  %s1 = inlined_call_operand.hbm [shape: f32[32,96], index: 1, kind: input, shape index: {}]
  %s2 = inlined_call_operand.hbm [shape: f32[32,32], index: 2, kind: input, shape index: {}]
  %s3 = inlined_call_operand.hbm [shape: f32[4,8,8], index: 3, kind: input, shape index: {}]
  %s4 = inlined_call_operand.hbm [shape: f32[2,8,32], index: 4, kind: output, shape index: {}]
  %s5 = sld [smem:[#allocation0]]
  $region65: #{tpu_custom_call.1} parent=0
    _
  %s7 = ssub.s32 1, %s5
  %s8 = scalar_select 0, %s7, %s5
  $region1: #{tpu_custom_call.1} parent=0
    #allocation2 [shape = 'u8[8192]{0}', space=vmem, size = 0x2000, scoped, tag = 'input window, operand 0']
    #allocation3 [shape = 's32[2]{0}', space=sflag, size = 0x8, scoped, tag = 'scoped memory for tpu_custom_call.1']
    #allocation4 [shape = 's32[2]{0}', space=sflag, size = 0x8, scoped, tag = 'scoped memory for tpu_custom_call.1']
    #allocation5 [shape = 'u8[16384]{0}', space=vmem, size = 0x4000, scoped, tag = 'input window, operand 1, single buffered']
    #allocation6 [shape = 's32[1]{0}', space=sflag, size = 0x4, scoped, tag = 'scoped memory for tpu_custom_call.1']
    #allocation7 [shape = 'u8[16384]{0}', space=vmem, size = 0x4000, scoped, tag = 'input window, operand 2, single buffered']
    #allocation8 [shape = 'u8[16384]{0}', space=vmem, size = 0x4000, scoped, tag = 'input window, operand 3, single buffered']
    #allocation9 [shape = 's32[1]{0}', space=sflag, size = 0x4, scoped, tag = 'scoped memory for tpu_custom_call.1']
    #allocation10 [shape = 'u8[8192]{0}', space=vmem, size = 0x2000, scoped, tag = 'output window, operand 0']
    %9 = vsyncpa [#allocation3], 0
    %s10 = scalar_lea.sflag [#allocation3], 1
    %11 = vsyncpa %s10, 0
    %12 = vsyncpa [#allocation6], 0
    %13 = vsyncpa [#allocation9], 0
    %14 = vsyncpa [#allocation4], 0
    %s15 = scalar_lea.sflag [#allocation4], 1
    %16 = vsyncpa %s15, 0
    loop: start=0, step=1, limit=4
    $region2: #{tpu_custom_call.1} parent=1 // loop_pre_header
      _
    $region3: #{tpu_custom_call.1} parent=1 // loop_header
      %s18 = sphi 0, %s22
      %p19 = scmp.ge.s32.totalorder %s18, 4
      %s28 = sphi 0, %s30
      %s31 = sphi 0, %s28
      %s32 = sphi 0, %s31
      %s48 = sphi 0, %s32
      %s52 = sphi 0, %s52
      %s54 = sphi 0, %s52
      %s55 = sphi 0, %s54
      %s69 = sphi 0, %s55
      %s73 = sphi 0, %s73
      %s75 = sphi 0, %s73
      %s76 = sphi 0, %s75
      %s90 = sphi 0, %s76
      %s94 = sphi 0, %s94
      %s96 = sphi 0, %s94
      %s97 = sphi 0, %s96
      %s111 = sphi 0, %s97
      %s117 = sphi 0, %s119
      %s120 = sphi 0, %s117
      %s121 = sphi 0, %s120
      %s137 = sphi 0, %s121
    $region4: #{tpu_custom_call.1} parent=1 // loop_header_branch
      %21 = sbr.rel (%p19) target = $region8
    $region5: #{tpu_custom_call.1} parent=1 // loop_body
      %s23 = ssub.s32 %s18, 1
      %s24 = ssub.s32 %s18, 2
      %s25 = sadd.s32 %s18, 1
      %s26 = ssub.s32 %s18, %s25
      %p27 = scmp.eq.s32.totalorder %s26, 0
      %s29 = sadd.s32 %s28, 1
      %s30 = scalar_select %p27, %s28, %s29
      %p33 = pneg %p27
      %p34 = scmp.eq.s32.totalorder %s18, 1
      %p35 = por %p33, %p34
      %p36 = scmp.ne.s32.totalorder %s28, %s31
      %p37 = scmp.eq.s32.totalorder %s18, 0
      %p38 = por %p36, %p37
      %p39 = scmp.ne.s32.totalorder %s28, %s31
      %p40 = scmp.eq.s32.totalorder %s23, 1
      %p41 = por %p39, %p40
      %p42 = scmp.ne.s32.totalorder %s31, %s32
      %p43 = scmp.eq.s32.totalorder %s23, 0
      %p44 = por %p42, %p43
      %p45 = scmp.ne.s32.totalorder %s31, %s32
      %p46 = scmp.eq.s32.totalorder %s24, 1
      %p47 = por %p45, %p46
      %p49 = scmp.ne.s32.totalorder %s32, %s48
      %p50 = scmp.eq.s32.totalorder %s24, 0
      %p51 = por %p49, %p50
      %s53 = sadd.s32 %s52, 1
      %p56 = scmp.eq.s32.totalorder %s18, 1
      %p57 = scmp.ne.s32.totalorder %s52, %s54
      %p58 = scmp.eq.s32.totalorder %s18, 0
      %p59 = por %p57, %p58
      %p60 = scmp.ne.s32.totalorder %s52, %s54
      %p61 = scmp.eq.s32.totalorder %s23, 1
      %p62 = por %p60, %p61
      %p63 = scmp.ne.s32.totalorder %s54, %s55
      %p64 = scmp.eq.s32.totalorder %s23, 0
      %p65 = por %p63, %p64
      %p66 = scmp.ne.s32.totalorder %s54, %s55
      %p67 = scmp.eq.s32.totalorder %s24, 1
      %p68 = por %p66, %p67
      %p70 = scmp.ne.s32.totalorder %s55, %s69
      %p71 = scmp.eq.s32.totalorder %s24, 0
      %p72 = por %p70, %p71
      %s74 = sadd.s32 %s73, 1
      %p77 = scmp.eq.s32.totalorder %s18, 1
      %p78 = scmp.ne.s32.totalorder %s73, %s75
      %p79 = scmp.eq.s32.totalorder %s18, 0
      %p80 = por %p78, %p79
      %p81 = scmp.ne.s32.totalorder %s73, %s75
      %p82 = scmp.eq.s32.totalorder %s23, 1
      %p83 = por %p81, %p82
      %p84 = scmp.ne.s32.totalorder %s75, %s76
      %p85 = scmp.eq.s32.totalorder %s23, 0
      %p86 = por %p84, %p85
      %p87 = scmp.ne.s32.totalorder %s75, %s76
      %p88 = scmp.eq.s32.totalorder %s24, 1
      %p89 = por %p87, %p88
      %p91 = scmp.ne.s32.totalorder %s76, %s90
      %p92 = scmp.eq.s32.totalorder %s24, 0
      %p93 = por %p91, %p92
      %s95 = sadd.s32 %s94, 1
      %p98 = scmp.eq.s32.totalorder %s18, 1
      %p99 = scmp.ne.s32.totalorder %s94, %s96
      %p100 = scmp.eq.s32.totalorder %s18, 0
      %p101 = por %p99, %p100
      %p102 = scmp.ne.s32.totalorder %s94, %s96
      %p103 = scmp.eq.s32.totalorder %s23, 1
      %p104 = por %p102, %p103
      %p105 = scmp.ne.s32.totalorder %s96, %s97
      %p106 = scmp.eq.s32.totalorder %s23, 0
      %p107 = por %p105, %p106
      %p108 = scmp.ne.s32.totalorder %s96, %s97
      %p109 = scmp.eq.s32.totalorder %s24, 1
      %p110 = por %p108, %p109
      %p112 = scmp.ne.s32.totalorder %s97, %s111
      %p113 = scmp.eq.s32.totalorder %s24, 0
      %p114 = por %p112, %p113
      %s115 = ssub.s32 %s18, %s25
      %p116 = scmp.eq.s32.totalorder %s115, 0
      %s118 = sadd.s32 %s117, 1
      %s119 = scalar_select %p116, %s117, %s118
      %p122 = pneg %p116
      %p123 = scmp.eq.s32.totalorder %s18, 1
      %p124 = por %p122, %p123
      %p125 = scmp.ne.s32.totalorder %s117, %s120
      %p126 = scmp.eq.s32.totalorder %s18, 0
      %p127 = por %p125, %p126
      %p128 = scmp.ne.s32.totalorder %s117, %s120
      %p129 = scmp.eq.s32.totalorder %s23, 1
      %p130 = por %p128, %p129
      %p131 = scmp.ne.s32.totalorder %s120, %s121
      %p132 = scmp.eq.s32.totalorder %s23, 0
      %p133 = por %p131, %p132
      %p134 = scmp.ne.s32.totalorder %s120, %s121
      %p135 = scmp.eq.s32.totalorder %s24, 1
      %p136 = por %p134, %p135
      %p138 = scmp.ne.s32.totalorder %s121, %s137
      %p139 = scmp.eq.s32.totalorder %s24, 0
      %p140 = por %p138, %p139
      %p141 = scmp.le.s32.totalorder 1, %s18
      %p142 = scmp.lt.s32.totalorder %s18, 3
      %p143 = pnand %p141, %p142
      %p144 = pneg %p143
      // Predicated region
      $region9: #{tpu_custom_call.1} parent=5 // pred_check
        _
      $region10: #{tpu_custom_call.1} parent=5 // pred_check_branch
        %146 = sbr.rel (%p143) target = $region12
      $region11: #{tpu_custom_call.1} parent=5 // pred_region
        %s147 = ssub.s32 %s18, 1
        // Predicated region
        $region13: #{tpu_custom_call.1} parent=11 // pred_check
          %p148 = pneg %p65
        $region14: #{tpu_custom_call.1} parent=11 // pred_check_branch
          %150 = sbr.rel (%p148) target = $region16
        $region15: #{tpu_custom_call.1} parent=11 // pred_region
          %s152 = ssub.s32 512, 512
          %153 = vsyncadd [#allocation6], %s152
          %s154 = sshll.u32 [#allocation5], 4
          %s155 = int_to_ptr.vmem [resolvable:$true] %s154
          %160 = dma.hbm_to_vmem [thread:$0]  %s1, 512, %s155, [#allocation6], 128, 128, 8
        $region16: #{tpu_custom_call.1} parent=11 // pred_fallthru
          _
        // Predicated region
        $region17: #{tpu_custom_call.1} parent=11 // pred_check
          %p161 = pneg %p86
        $region18: #{tpu_custom_call.1} parent=11 // pred_check_branch
          %163 = sbr.rel (%p161) target = $region20
        $region19: #{tpu_custom_call.1} parent=11 // pred_region
          %s165 = ssub.s32 512, 512
          %166 = vsyncadd [#allocation6], %s165
          %s167 = sshll.u32 [#allocation7], 4
          %s168 = int_to_ptr.vmem [resolvable:$true] %s167
          %173 = dma.hbm_to_vmem [thread:$0]  %s2, 512, %s168, [#allocation6], 128, 128, 8
        $region20: #{tpu_custom_call.1} parent=11 // pred_fallthru
          _
        // Predicated region
        $region21: #{tpu_custom_call.1} parent=11 // pred_check
          %p174 = pneg %p107
        $region22: #{tpu_custom_call.1} parent=11 // pred_check_branch
          %176 = sbr.rel (%p174) target = $region24
        $region23: #{tpu_custom_call.1} parent=11 // pred_region
          %s178 = ssub.s32 512, 512
          %179 = vsyncadd [#allocation9], %s178
          %s180 = sshll.u32 [#allocation8], 4
          %s181 = int_to_ptr.vmem [resolvable:$true] %s180
          %186 = dma.hbm_to_vmem [thread:$0]  %s3, 512, %s181, [#allocation9], 128, 128, 8
        $region24: #{tpu_custom_call.1} parent=11 // pred_fallthru
          _
      $region12: #{tpu_custom_call.1} parent=5 // pred_fallthru
        _
      %p187 = scmp.lt.s32.totalorder %s18, 2
      // Predicated region
      $region25: #{tpu_custom_call.1} parent=5 // pred_check
        %p188 = pneg %p187
      $region26: #{tpu_custom_call.1} parent=5 // pred_check_branch
        %190 = sbr.rel (%p188) target = $region28
      $region27: #{tpu_custom_call.1} parent=5 // pred_region
        // Predicated region
        $region29: #{tpu_custom_call.1} parent=27 // pred_check
          %p191 = pneg %p38
        $region30: #{tpu_custom_call.1} parent=27 // pred_check_branch
          %193 = sbr.rel (%p191) target = $region32
        $region31: #{tpu_custom_call.1} parent=27 // pred_region
          %s194 = sand.u32 %s28, 1
          %s195 = scalar_lea.sflag [#allocation3], %s194
          %s196 = sand.u32 %s28, 1
          %s197 = smul.addr %s196, 8
          %s198 = scalar_lea.vmem [#allocation2], %s197
          %s200 = ssub.s32 128, 128
          %201 = vsyncadd %s195, %s200
          %s202 = smul.addr %s18, 128
          %s203 = scalar_lea.hbm %s0, %s202
          %s205 = sshll.u32 %s198, 4
          %s206 = int_to_ptr.vmem [resolvable:$true] %s205
          %208 = dma.hbm_to_vmem [thread:$0]  %s203, 128, %s206, %s195
        $region32: #{tpu_custom_call.1} parent=27 // pred_fallthru
          _
      $region28: #{tpu_custom_call.1} parent=5 // pred_fallthru
        _
      %p209 = scmp.le.s32.totalorder 1, %s18
      %p210 = scmp.lt.s32.totalorder %s18, 3
      %p211 = pnand %p209, %p210
      %p212 = pneg %p211
      // Predicated region
      $region33: #{tpu_custom_call.1} parent=5 // pred_check
        _
      $region34: #{tpu_custom_call.1} parent=5 // pred_check_branch
        %214 = sbr.rel (%p211) target = $region36
      $region35: #{tpu_custom_call.1} parent=5 // pred_region
        %s215 = ssub.s32 %s18, 1
        %s216 = sand.u32 %s31, 1
        %s217 = scalar_lea.sflag [#allocation3], %s216
        %s218 = sand.u32 %s31, 1
        %s219 = smul.addr %s218, 8
        %s220 = scalar_lea.vmem [#allocation2], %s219
        // Predicated region
        $region37: #{tpu_custom_call.1} parent=35 // pred_check
          %p221 = pneg %p44
        $region38: #{tpu_custom_call.1} parent=35 // pred_check_branch
          %223 = sbr.rel (%p221) target = $region40
        $region39: #{tpu_custom_call.1} parent=35 // pred_region
          %224 = dma.done %s217, 128
        $region40: #{tpu_custom_call.1} parent=35 // pred_fallthru
          _
        // Predicated region
        $region41: #{tpu_custom_call.1} parent=35 // pred_check
          %p225 = pneg %p65
        $region42: #{tpu_custom_call.1} parent=35 // pred_check_branch
          %227 = sbr.rel (%p225) target = $region44
        $region43: #{tpu_custom_call.1} parent=35 // pred_region
          %228 = dma.done [#allocation6], 512
        $region44: #{tpu_custom_call.1} parent=35 // pred_fallthru
          _
        // Predicated region
        $region45: #{tpu_custom_call.1} parent=35 // pred_check
          %p229 = pneg %p86
        $region46: #{tpu_custom_call.1} parent=35 // pred_check_branch
          %231 = sbr.rel (%p229) target = $region48
        $region47: #{tpu_custom_call.1} parent=35 // pred_region
          %232 = dma.done [#allocation6], 512
        $region48: #{tpu_custom_call.1} parent=35 // pred_fallthru
          _
        // Predicated region
        $region49: #{tpu_custom_call.1} parent=35 // pred_check
          %p233 = pneg %p107
        $region50: #{tpu_custom_call.1} parent=35 // pred_check_branch
          %235 = sbr.rel (%p233) target = $region52
        $region51: #{tpu_custom_call.1} parent=35 // pred_region
          %236 = dma.done [#allocation9], 512
        $region52: #{tpu_custom_call.1} parent=35 // pred_fallthru
          _
        %s237 = sand.u32 %s31, 1
        %s238 = scalar_lea.sflag [#allocation3], %s237
        %s239 = sand.u32 %s31, 1
        %s240 = smul.addr %s239, 8
        %s241 = scalar_lea.vmem [#allocation2], %s240
        %p242 = pneg %p44
        %p243 = pneg %p41
        %p244 = pneg %p65
        %p245 = pneg %p62
        %p246 = pneg %p86
        %p247 = pneg %p83
        %p248 = pneg %p107
        %p249 = pneg %p104
        %p250 = pneg %p133
        %p251 = pneg %p130
        %s252 = sand.u32 %s120, 1
        %s253 = scalar_lea.sflag [#allocation4], %s252
        %s254 = sand.u32 %s120, 1
        %s255 = smul.addr %s254, 8
        %s256 = scalar_lea.vmem [#allocation10], %s255
        %v257 = vld [vmem:[%s220] sm:$0xff]
        %v258 = vld [vmem:[#allocation5] sm:$0xff]
        %v259 = vld [vmem:[#allocation5 + $0x8] sm:$0xff]
        %v260 = vld [vmem:[#allocation5 + $0x10] sm:$0xff]
        %v261 = vld [vmem:[#allocation5 + $0x18] sm:$0xff]
        %vm262 = vcmask 261120
        %v264 = vsel %vm262, %v257, 0
        %266 = vmatprep.subr.mxu0 0.0
        %267 = vmatpush1.msra.mxu0 %v258
        %268 = vmatprep.subr.mxu0 0.0
        %269 = vmatpush1.msra.mxu0 %v259
        %270 = vmatprep.subr.mxu0 0.0
        %271 = vmatpush1.msra.mxu0 %v260
        %272 = vmatprep.subr.mxu0 0.0
        %273 = vmatpush1.msra.mxu0 %v261
        %274 = vmatprep.subr.mxu0 0.0
        %275 = vmatpush1.msra.mxu0 0.0
        %276 = vmatprep.subr.mxu0 0.0
        %277 = vmatpush1.msra.mxu0 0.0
        %278 = vmatprep.subr.mxu0 0.0
        %279 = vmatpush1.msra.mxu0 0.0
        %280 = vmatprep.subr.mxu0 0.0
        %281 = vmatpush1.msra.mxu0 0.0
        %282 = vmatprep.subr.mxu0 0.0
        %283 = vmatpush1.msra.mxu0 0.0
        %284 = vmatprep.subr.mxu0 0.0
        %285 = vmatpush1.msra.mxu0 0.0
        %286 = vmatprep.subr.mxu0 0.0
        %287 = vmatpush1.msra.mxu0 0.0
        %288 = vmatprep.subr.mxu0 0.0
        %289 = vmatpush1.msra.mxu0 0.0
        %290 = vmatprep.subr.mxu0 0.0
        %291 = vmatpush1.msra.mxu0 0.0
        %292 = vmatprep.subr.mxu0 0.0
        %293 = vmatpush1.msra.mxu0 0.0
        %294 = vmatprep.subr.mxu0 0.0
        %295 = vmatpush1.msra.mxu0 0.0
        %296 = vmatprep.subr.mxu0 0.0
        %297 = vmatpush1.msra.mxu0 0.0
        %298 = vmatprep.subr.mxu0 0.0
        %299 = vmatpush1.msra.mxu0 0.0
        %300 = vmatprep.subr.mxu0 0.0
        %301 = vmatpush1.msra.mxu0 0.0
        %302 = vmatprep.subr.mxu0 0.0
        %303 = vmatpush1.msra.mxu0 0.0
        %304 = vmatprep.subr.mxu0 0.0
        %305 = vmatpush1.msra.mxu0 0.0
        %306 = vmatprep.subr.mxu0 0.0
        %307 = vmatpush1.msra.mxu0 0.0
        %308 = vmatprep.subr.mxu0 0.0
        %309 = vmatpush1.msra.mxu0 0.0
        %310 = vmatprep.subr.mxu0 0.0
        %311 = vmatpush1.msra.mxu0 0.0
        %312 = vmatprep.subr.mxu0 0.0
        %313 = vmatpush1.msra.mxu0 0.0
        %314 = vmatprep.subr.mxu0 0.0
        %315 = vmatpush1.msra.mxu0 0.0
        %316 = vmatprep.subr.mxu0 0.0
        %317 = vmatpush1.msra.mxu0 0.0
        %318 = vmatprep.subr.mxu0 0.0
        %319 = vmatpush1.msra.mxu0 0.0
        %320 = vmatprep.subr.mxu0 0.0
        %321 = vmatpush1.msra.mxu0 0.0
        %322 = vmatprep.subr.mxu0 0.0
        %323 = vmatpush1.msra.mxu0 0.0
        %324 = vmatprep.subr.mxu0 0.0
        %325 = vmatpush1.msra.mxu0 0.0
        %326 = vmatprep.subr.mxu0 0.0
        %327 = vmatpush1.msra.mxu0 0.0
        %328 = vmatprep.subr.mxu0 0.0
        %329 = vmatpush1.msra.mxu0 0.0
        %330 = vmatprep.mubr.f32.mxu0 0.0
        %331 = vmatmul.mubr.f32.gmra.mrb[0].mxu0 %v264
        %v332 = vpop.f32.mrb[0].mxu0
        %v333 = vadd.f32 0.0, %v332
        %v334 = vpop.f32.mrb[0].mxu0
        %335 = vdwg.mxu0
        %v336 = vld [vmem:[#allocation8] sm:$0xff]
        %338 = vrot.lane.b32.xlu0 %v333, 96
        %v339 = vpop.permute.xlu0 %338
        %vm340 = vcmask 64512
        %v341 = vsel %vm340, %v333, 0
        %v343 = vsel %vm340, %v339, 0
        %345 = vmatprep.subr.mxu0 0.0
        %346 = vmatpush1.xpose.msra.mxu0 %v343
        %347 = vmatprep.subr.mxu0 0.0
        %348 = vmatpush1.xpose.msra.mxu0 0.0
        %349 = vmatprep.subr.mxu0 0.0
        %350 = vmatpush1.xpose.msra.mxu0 0.0
        %351 = vmatprep.subr.mxu0 0.0
        %352 = vmatpush1.xpose.msra.mxu0 0.0
        %353 = vmatprep.subr.mxu0 0.0
        %354 = vmatpush1.xpose.msra.mxu0 0.0
        %355 = vmatprep.subr.mxu0 0.0
        %356 = vmatpush1.xpose.msra.mxu0 0.0
        %357 = vmatprep.subr.mxu0 0.0
        %358 = vmatpush1.xpose.msra.mxu0 0.0
        %359 = vmatprep.subr.mxu0 0.0
        %360 = vmatpush1.xpose.msra.mxu0 0.0
        %361 = vmatprep.subr.mxu0 0.0
        %362 = vmatpush1.xpose.msra.mxu0 0.0
        %363 = vmatprep.subr.mxu0 0.0
        %364 = vmatpush1.xpose.msra.mxu0 0.0
        %365 = vmatprep.subr.mxu0 0.0
        %366 = vmatpush1.xpose.msra.mxu0 0.0
        %367 = vmatprep.subr.mxu0 0.0
        %368 = vmatpush1.xpose.msra.mxu0 0.0
        %369 = vmatprep.subr.mxu0 0.0
        %370 = vmatpush1.xpose.msra.mxu0 0.0
        %371 = vmatprep.subr.mxu0 0.0
        %372 = vmatpush1.xpose.msra.mxu0 0.0
        %373 = vmatprep.subr.mxu0 0.0
        %374 = vmatpush1.xpose.msra.mxu0 0.0
        %375 = vmatprep.subr.mxu0 0.0
        %376 = vmatpush1.xpose.msra.mxu0 0.0
        %377 = vmatprep.subr.mxu0 0.0
        %378 = vmatpush1.xpose.msra.mxu0 0.0
        %379 = vmatprep.subr.mxu0 0.0
        %380 = vmatpush1.xpose.msra.mxu0 0.0
        %381 = vmatprep.subr.mxu0 0.0
        %382 = vmatpush1.xpose.msra.mxu0 0.0
        %383 = vmatprep.subr.mxu0 0.0
        %384 = vmatpush1.xpose.msra.mxu0 0.0
        %385 = vmatprep.subr.mxu0 0.0
        %386 = vmatpush1.xpose.msra.mxu0 0.0
        %387 = vmatprep.subr.mxu0 0.0
        %388 = vmatpush1.xpose.msra.mxu0 0.0
        %389 = vmatprep.subr.mxu0 0.0
        %390 = vmatpush1.xpose.msra.mxu0 0.0
        %391 = vmatprep.subr.mxu0 0.0
        %392 = vmatpush1.xpose.msra.mxu0 0.0
        %393 = vmatprep.subr.mxu0 0.0
        %394 = vmatpush1.xpose.msra.mxu0 0.0
        %395 = vmatprep.subr.mxu0 0.0
        %396 = vmatpush1.xpose.msra.mxu0 0.0
        %397 = vmatprep.subr.mxu0 0.0
        %398 = vmatpush1.xpose.msra.mxu0 0.0
        %399 = vmatprep.subr.mxu0 0.0
        %400 = vmatpush1.xpose.msra.mxu0 0.0
        %401 = vmatprep.subr.mxu0 0.0
        %402 = vmatpush1.xpose.msra.mxu0 0.0
        %403 = vmatprep.subr.mxu0 0.0
        %404 = vmatpush1.xpose.msra.mxu0 0.0
        %405 = vmatprep.subr.mxu0 0.0
        %406 = vmatpush1.xpose.msra.mxu0 0.0
        %407 = vmatprep.subr.mxu0 0.0
        %408 = vmatpush1.xpose.msra.mxu0 0.0
        %409 = vmatprep.mubr.f32.mxu0 0.0
        %410 = vmatmul.mubr.f32.gmra.mrb[0].mxu0 %v341
        %v411 = vpop.f32.mrb[0].mxu0
        %v412 = vadd.f32 %v336, %v411
        %v413 = vpop.f32.mrb[0].mxu0
        %414 = vdwg.mxu0
        %v415 = vsel %vm340, %v412, -inf
        %416 = vmax.xlane.f32.xlu0 %v415
        %v417 = vpop.xlane.xlu0 %416
        %v418 = vsub.f32 %v412, %v417
        %v419 = vmul.f32 %v418, 1.442695
        %v420 = vpow.pop %v419
        %v421 = vsel %vm340, %v420, 0.0
        %422 = vadd.xlane.f32.xlu0 %v421
        %v423 = vpop.xlane.xlu0 %422
        %424 = vrot.lane.b32.xlu0 %v333, 64
        %v425 = vpop.permute.xlu0 %424
        %v428 = vsel %vm340, %v420, 0
        %430 = vmatprep.subr.mxu0 0.0
        %431 = vmatpush1.msra.mxu0 %v425
        %432 = vmatprep.subr.mxu0 0.0
        %433 = vmatpush1.msra.mxu0 0.0
        %434 = vmatprep.subr.mxu0 0.0
        %435 = vmatpush1.msra.mxu0 0.0
        %436 = vmatprep.subr.mxu0 0.0
        %437 = vmatpush1.msra.mxu0 0.0
        %438 = vmatprep.subr.mxu0 0.0
        %439 = vmatpush1.msra.mxu0 0.0
        %440 = vmatprep.subr.mxu0 0.0
        %441 = vmatpush1.msra.mxu0 0.0
        %442 = vmatprep.subr.mxu0 0.0
        %443 = vmatpush1.msra.mxu0 0.0
        %444 = vmatprep.subr.mxu0 0.0
        %445 = vmatpush1.msra.mxu0 0.0
        %446 = vmatprep.subr.mxu0 0.0
        %447 = vmatpush1.msra.mxu0 0.0
        %448 = vmatprep.subr.mxu0 0.0
        %449 = vmatpush1.msra.mxu0 0.0
        %450 = vmatprep.subr.mxu0 0.0
        %451 = vmatpush1.msra.mxu0 0.0
        %452 = vmatprep.subr.mxu0 0.0
        %453 = vmatpush1.msra.mxu0 0.0
        %454 = vmatprep.subr.mxu0 0.0
        %455 = vmatpush1.msra.mxu0 0.0
        %456 = vmatprep.subr.mxu0 0.0
        %457 = vmatpush1.msra.mxu0 0.0
        %458 = vmatprep.subr.mxu0 0.0
        %459 = vmatpush1.msra.mxu0 0.0
        %460 = vmatprep.subr.mxu0 0.0
        %461 = vmatpush1.msra.mxu0 0.0
        %462 = vmatprep.subr.mxu0 0.0
        %463 = vmatpush1.msra.mxu0 0.0
        %464 = vmatprep.subr.mxu0 0.0
        %465 = vmatpush1.msra.mxu0 0.0
        %466 = vmatprep.subr.mxu0 0.0
        %467 = vmatpush1.msra.mxu0 0.0
        %468 = vmatprep.subr.mxu0 0.0
        %469 = vmatpush1.msra.mxu0 0.0
        %470 = vmatprep.subr.mxu0 0.0
        %471 = vmatpush1.msra.mxu0 0.0
        %472 = vmatprep.subr.mxu0 0.0
        %473 = vmatpush1.msra.mxu0 0.0
        %474 = vmatprep.subr.mxu0 0.0
        %475 = vmatpush1.msra.mxu0 0.0
        %476 = vmatprep.subr.mxu0 0.0
        %477 = vmatpush1.msra.mxu0 0.0
        %478 = vmatprep.subr.mxu0 0.0
        %479 = vmatpush1.msra.mxu0 0.0
        %480 = vmatprep.subr.mxu0 0.0
        %481 = vmatpush1.msra.mxu0 0.0
        %482 = vmatprep.subr.mxu0 0.0
        %483 = vmatpush1.msra.mxu0 0.0
        %484 = vmatprep.subr.mxu0 0.0
        %485 = vmatpush1.msra.mxu0 0.0
        %486 = vmatprep.subr.mxu0 0.0
        %487 = vmatpush1.msra.mxu0 0.0
        %488 = vmatprep.subr.mxu0 0.0
        %489 = vmatpush1.msra.mxu0 0.0
        %490 = vmatprep.subr.mxu0 0.0
        %491 = vmatpush1.msra.mxu0 0.0
        %492 = vmatprep.subr.mxu0 0.0
        %493 = vmatpush1.msra.mxu0 0.0
        %494 = vmatprep.mubr.f32.mxu0 0.0
        %495 = vmatmul.mubr.f32.gmra.mrb[0].mxu0 %v428
        %v496 = vpop.f32.mrb[0].mxu0
        %v497 = vadd.f32 0.0, %v496
        %v498 = vpop.f32.mrb[0].mxu0
        %499 = vdwg.mxu0
        %v500 = vrcp.pop %v423
        %v501 = vmul.f32 %v497, %v500
        %s502 = scalar_lea.vmem [#allocation8], 8
        %v503 = vld [vmem:[%s502] sm:$0xff]
        %504 = vrot.lane.b32.xlu0 %v333, 120
        %v505 = vpop.permute.xlu0 %504
        %506 = vrot.lane.b32.xlu0 %v333, 88
        %v507 = vpop.permute.xlu0 %506
        %v508 = vsel %vm340, %v505, 0
        %v510 = vsel %vm340, %v507, 0
        %512 = vmatprep.subr.mxu0 0.0
        %513 = vmatpush1.xpose.msra.mxu0 %v510
        %514 = vmatprep.subr.mxu0 0.0
        %515 = vmatpush1.xpose.msra.mxu0 0.0
        %516 = vmatprep.subr.mxu0 0.0
        %517 = vmatpush1.xpose.msra.mxu0 0.0
        %518 = vmatprep.subr.mxu0 0.0
        %519 = vmatpush1.xpose.msra.mxu0 0.0
        %520 = vmatprep.subr.mxu0 0.0
        %521 = vmatpush1.xpose.msra.mxu0 0.0
        %522 = vmatprep.subr.mxu0 0.0
        %523 = vmatpush1.xpose.msra.mxu0 0.0
        %524 = vmatprep.subr.mxu0 0.0
        %525 = vmatpush1.xpose.msra.mxu0 0.0
        %526 = vmatprep.subr.mxu0 0.0
        %527 = vmatpush1.xpose.msra.mxu0 0.0
        %528 = vmatprep.subr.mxu0 0.0
        %529 = vmatpush1.xpose.msra.mxu0 0.0
        %530 = vmatprep.subr.mxu0 0.0
        %531 = vmatpush1.xpose.msra.mxu0 0.0
        %532 = vmatprep.subr.mxu0 0.0
        %533 = vmatpush1.xpose.msra.mxu0 0.0
        %534 = vmatprep.subr.mxu0 0.0
        %535 = vmatpush1.xpose.msra.mxu0 0.0
        %536 = vmatprep.subr.mxu0 0.0
        %537 = vmatpush1.xpose.msra.mxu0 0.0
        %538 = vmatprep.subr.mxu0 0.0
        %539 = vmatpush1.xpose.msra.mxu0 0.0
        %540 = vmatprep.subr.mxu0 0.0
        %541 = vmatpush1.xpose.msra.mxu0 0.0
        %542 = vmatprep.subr.mxu0 0.0
        %543 = vmatpush1.xpose.msra.mxu0 0.0
        %544 = vmatprep.subr.mxu0 0.0
        %545 = vmatpush1.xpose.msra.mxu0 0.0
        %546 = vmatprep.subr.mxu0 0.0
        %547 = vmatpush1.xpose.msra.mxu0 0.0
        %548 = vmatprep.subr.mxu0 0.0
        %549 = vmatpush1.xpose.msra.mxu0 0.0
        %550 = vmatprep.subr.mxu0 0.0
        %551 = vmatpush1.xpose.msra.mxu0 0.0
        %552 = vmatprep.subr.mxu0 0.0
        %553 = vmatpush1.xpose.msra.mxu0 0.0
        %554 = vmatprep.subr.mxu0 0.0
        %555 = vmatpush1.xpose.msra.mxu0 0.0
        %556 = vmatprep.subr.mxu0 0.0
        %557 = vmatpush1.xpose.msra.mxu0 0.0
        %558 = vmatprep.subr.mxu0 0.0
        %559 = vmatpush1.xpose.msra.mxu0 0.0
        %560 = vmatprep.subr.mxu0 0.0
        %561 = vmatpush1.xpose.msra.mxu0 0.0
        %562 = vmatprep.subr.mxu0 0.0
        %563 = vmatpush1.xpose.msra.mxu0 0.0
        %564 = vmatprep.subr.mxu0 0.0
        %565 = vmatpush1.xpose.msra.mxu0 0.0
        %566 = vmatprep.subr.mxu0 0.0
        %567 = vmatpush1.xpose.msra.mxu0 0.0
        %568 = vmatprep.subr.mxu0 0.0
        %569 = vmatpush1.xpose.msra.mxu0 0.0
        %570 = vmatprep.subr.mxu0 0.0
        %571 = vmatpush1.xpose.msra.mxu0 0.0
        %572 = vmatprep.subr.mxu0 0.0
        %573 = vmatpush1.xpose.msra.mxu0 0.0
        %574 = vmatprep.subr.mxu0 0.0
        %575 = vmatpush1.xpose.msra.mxu0 0.0
        %576 = vmatprep.mubr.f32.mxu0 0.0
        %577 = vmatmul.mubr.f32.gmra.mrb[0].mxu0 %v508
        %v578 = vpop.f32.mrb[0].mxu0
        %v579 = vadd.f32 %v503, %v578
        %v580 = vpop.f32.mrb[0].mxu0
        %581 = vdwg.mxu0
        %v582 = vsel %vm340, %v579, -inf
        %583 = vmax.xlane.f32.xlu0 %v582
        %v584 = vpop.xlane.xlu0 %583
        %v585 = vsub.f32 %v579, %v584
        %v586 = vmul.f32 %v585, 1.442695
        %v587 = vpow.pop %v586
        %v588 = vsel %vm340, %v587, 0.0
        %589 = vadd.xlane.f32.xlu0 %v588
        %v590 = vpop.xlane.xlu0 %589
        %591 = vrot.lane.b32.xlu0 %v333, 56
        %v592 = vpop.permute.xlu0 %591
        %v595 = vsel %vm340, %v587, 0
        %597 = vmatprep.subr.mxu0 0.0
        %598 = vmatpush1.msra.mxu0 %v592
        %599 = vmatprep.subr.mxu0 0.0
        %600 = vmatpush1.msra.mxu0 0.0
        %601 = vmatprep.subr.mxu0 0.0
        %602 = vmatpush1.msra.mxu0 0.0
        %603 = vmatprep.subr.mxu0 0.0
        %604 = vmatpush1.msra.mxu0 0.0
        %605 = vmatprep.subr.mxu0 0.0
        %606 = vmatpush1.msra.mxu0 0.0
        %607 = vmatprep.subr.mxu0 0.0
        %608 = vmatpush1.msra.mxu0 0.0
        %609 = vmatprep.subr.mxu0 0.0
        %610 = vmatpush1.msra.mxu0 0.0
        %611 = vmatprep.subr.mxu0 0.0
        %612 = vmatpush1.msra.mxu0 0.0
        %613 = vmatprep.subr.mxu0 0.0
        %614 = vmatpush1.msra.mxu0 0.0
        %615 = vmatprep.subr.mxu0 0.0
        %616 = vmatpush1.msra.mxu0 0.0
        %617 = vmatprep.subr.mxu0 0.0
        %618 = vmatpush1.msra.mxu0 0.0
        %619 = vmatprep.subr.mxu0 0.0
        %620 = vmatpush1.msra.mxu0 0.0
        %621 = vmatprep.subr.mxu0 0.0
        %622 = vmatpush1.msra.mxu0 0.0
        %623 = vmatprep.subr.mxu0 0.0
        %624 = vmatpush1.msra.mxu0 0.0
        %625 = vmatprep.subr.mxu0 0.0
        %626 = vmatpush1.msra.mxu0 0.0
        %627 = vmatprep.subr.mxu0 0.0
        %628 = vmatpush1.msra.mxu0 0.0
        %629 = vmatprep.subr.mxu0 0.0
        %630 = vmatpush1.msra.mxu0 0.0
        %631 = vmatprep.subr.mxu0 0.0
        %632 = vmatpush1.msra.mxu0 0.0
        %633 = vmatprep.subr.mxu0 0.0
        %634 = vmatpush1.msra.mxu0 0.0
        %635 = vmatprep.subr.mxu0 0.0
        %636 = vmatpush1.msra.mxu0 0.0
        %637 = vmatprep.subr.mxu0 0.0
        %638 = vmatpush1.msra.mxu0 0.0
        %639 = vmatprep.subr.mxu0 0.0
        %640 = vmatpush1.msra.mxu0 0.0
        %641 = vmatprep.subr.mxu0 0.0
        %642 = vmatpush1.msra.mxu0 0.0
        %643 = vmatprep.subr.mxu0 0.0
        %644 = vmatpush1.msra.mxu0 0.0
        %645 = vmatprep.subr.mxu0 0.0
        %646 = vmatpush1.msra.mxu0 0.0
        %647 = vmatprep.subr.mxu0 0.0
        %648 = vmatpush1.msra.mxu0 0.0
        %649 = vmatprep.subr.mxu0 0.0
        %650 = vmatpush1.msra.mxu0 0.0
        %651 = vmatprep.subr.mxu0 0.0
        %652 = vmatpush1.msra.mxu0 0.0
        %653 = vmatprep.subr.mxu0 0.0
        %654 = vmatpush1.msra.mxu0 0.0
        %655 = vmatprep.subr.mxu0 0.0
        %656 = vmatpush1.msra.mxu0 0.0
        %657 = vmatprep.subr.mxu0 0.0
        %658 = vmatpush1.msra.mxu0 0.0
        %659 = vmatprep.subr.mxu0 0.0
        %660 = vmatpush1.msra.mxu0 0.0
        %661 = vmatprep.mubr.f32.mxu0 0.0
        %662 = vmatmul.mubr.f32.gmra.mrb[0].mxu0 %v595
        %v663 = vpop.f32.mrb[0].mxu0
        %v664 = vadd.f32 0.0, %v663
        %v665 = vpop.f32.mrb[0].mxu0
        %666 = vdwg.mxu0
        %v667 = vrcp.pop %v590
        %v668 = vmul.f32 %v664, %v667
        %s669 = scalar_lea.vmem [#allocation8], 16
        %v670 = vld [vmem:[%s669] sm:$0xff]
        %671 = vrot.lane.b32.xlu0 %v333, 112
        %v672 = vpop.permute.xlu0 %671
        %673 = vrot.lane.b32.xlu0 %v333, 80
        %v674 = vpop.permute.xlu0 %673
        %v675 = vsel %vm340, %v672, 0
        %v677 = vsel %vm340, %v674, 0
        %679 = vmatprep.subr.mxu0 0.0
        %680 = vmatpush1.xpose.msra.mxu0 %v677
        %681 = vmatprep.subr.mxu0 0.0
        %682 = vmatpush1.xpose.msra.mxu0 0.0
        %683 = vmatprep.subr.mxu0 0.0
        %684 = vmatpush1.xpose.msra.mxu0 0.0
        %685 = vmatprep.subr.mxu0 0.0
        %686 = vmatpush1.xpose.msra.mxu0 0.0
        %687 = vmatprep.subr.mxu0 0.0
        %688 = vmatpush1.xpose.msra.mxu0 0.0
        %689 = vmatprep.subr.mxu0 0.0
        %690 = vmatpush1.xpose.msra.mxu0 0.0
        %691 = vmatprep.subr.mxu0 0.0
        %692 = vmatpush1.xpose.msra.mxu0 0.0
        %693 = vmatprep.subr.mxu0 0.0
        %694 = vmatpush1.xpose.msra.mxu0 0.0
        %695 = vmatprep.subr.mxu0 0.0
        %696 = vmatpush1.xpose.msra.mxu0 0.0
        %697 = vmatprep.subr.mxu0 0.0
        %698 = vmatpush1.xpose.msra.mxu0 0.0
        %699 = vmatprep.subr.mxu0 0.0
        %700 = vmatpush1.xpose.msra.mxu0 0.0
        %701 = vmatprep.subr.mxu0 0.0
        %702 = vmatpush1.xpose.msra.mxu0 0.0
        %703 = vmatprep.subr.mxu0 0.0
        %704 = vmatpush1.xpose.msra.mxu0 0.0
        %705 = vmatprep.subr.mxu0 0.0
        %706 = vmatpush1.xpose.msra.mxu0 0.0
        %707 = vmatprep.subr.mxu0 0.0
        %708 = vmatpush1.xpose.msra.mxu0 0.0
        %709 = vmatprep.subr.mxu0 0.0
        %710 = vmatpush1.xpose.msra.mxu0 0.0
        %711 = vmatprep.subr.mxu0 0.0
        %712 = vmatpush1.xpose.msra.mxu0 0.0
        %713 = vmatprep.subr.mxu0 0.0
        %714 = vmatpush1.xpose.msra.mxu0 0.0
        %715 = vmatprep.subr.mxu0 0.0
        %716 = vmatpush1.xpose.msra.mxu0 0.0
        %717 = vmatprep.subr.mxu0 0.0
        %718 = vmatpush1.xpose.msra.mxu0 0.0
        %719 = vmatprep.subr.mxu0 0.0
        %720 = vmatpush1.xpose.msra.mxu0 0.0
        %721 = vmatprep.subr.mxu0 0.0
        %722 = vmatpush1.xpose.msra.mxu0 0.0
        %723 = vmatprep.subr.mxu0 0.0
        %724 = vmatpush1.xpose.msra.mxu0 0.0
        %725 = vmatprep.subr.mxu0 0.0
        %726 = vmatpush1.xpose.msra.mxu0 0.0
        %727 = vmatprep.subr.mxu0 0.0
        %728 = vmatpush1.xpose.msra.mxu0 0.0
        %729 = vmatprep.subr.mxu0 0.0
        %730 = vmatpush1.xpose.msra.mxu0 0.0
        %731 = vmatprep.subr.mxu0 0.0
        %732 = vmatpush1.xpose.msra.mxu0 0.0
        %733 = vmatprep.subr.mxu0 0.0
        %734 = vmatpush1.xpose.msra.mxu0 0.0
        %735 = vmatprep.subr.mxu0 0.0
        %736 = vmatpush1.xpose.msra.mxu0 0.0
        %737 = vmatprep.subr.mxu0 0.0
        %738 = vmatpush1.xpose.msra.mxu0 0.0
        %739 = vmatprep.subr.mxu0 0.0
        %740 = vmatpush1.xpose.msra.mxu0 0.0
        %741 = vmatprep.subr.mxu0 0.0
        %742 = vmatpush1.xpose.msra.mxu0 0.0
        %743 = vmatprep.mubr.f32.mxu0 0.0
        %744 = vmatmul.mubr.f32.gmra.mrb[0].mxu0 %v675
        %v745 = vpop.f32.mrb[0].mxu0
        %v746 = vadd.f32 %v670, %v745
        %v747 = vpop.f32.mrb[0].mxu0
        %748 = vdwg.mxu0
        %v749 = vsel %vm340, %v746, -inf
        %750 = vmax.xlane.f32.xlu0 %v749
        %v751 = vpop.xlane.xlu0 %750
        %v752 = vsub.f32 %v746, %v751
        %v753 = vmul.f32 %v752, 1.442695
        %v754 = vpow.pop %v753
        %v755 = vsel %vm340, %v754, 0.0
        %756 = vadd.xlane.f32.xlu0 %v755
        %v757 = vpop.xlane.xlu0 %756
        %758 = vrot.lane.b32.xlu0 %v333, 48
        %v759 = vpop.permute.xlu0 %758
        %v762 = vsel %vm340, %v754, 0
        %764 = vmatprep.subr.mxu0 0.0
        %765 = vmatpush1.msra.mxu0 %v759
        %766 = vmatprep.subr.mxu0 0.0
        %767 = vmatpush1.msra.mxu0 0.0
        %768 = vmatprep.subr.mxu0 0.0
        %769 = vmatpush1.msra.mxu0 0.0
        %770 = vmatprep.subr.mxu0 0.0
        %771 = vmatpush1.msra.mxu0 0.0
        %772 = vmatprep.subr.mxu0 0.0
        %773 = vmatpush1.msra.mxu0 0.0
        %774 = vmatprep.subr.mxu0 0.0
        %775 = vmatpush1.msra.mxu0 0.0
        %776 = vmatprep.subr.mxu0 0.0
        %777 = vmatpush1.msra.mxu0 0.0
        %778 = vmatprep.subr.mxu0 0.0
        %779 = vmatpush1.msra.mxu0 0.0
        %780 = vmatprep.subr.mxu0 0.0
        %781 = vmatpush1.msra.mxu0 0.0
        %782 = vmatprep.subr.mxu0 0.0
        %783 = vmatpush1.msra.mxu0 0.0
        %784 = vmatprep.subr.mxu0 0.0
        %785 = vmatpush1.msra.mxu0 0.0
        %786 = vmatprep.subr.mxu0 0.0
        %787 = vmatpush1.msra.mxu0 0.0
        %788 = vmatprep.subr.mxu0 0.0
        %789 = vmatpush1.msra.mxu0 0.0
        %790 = vmatprep.subr.mxu0 0.0
        %791 = vmatpush1.msra.mxu0 0.0
        %792 = vmatprep.subr.mxu0 0.0
        %793 = vmatpush1.msra.mxu0 0.0
        %794 = vmatprep.subr.mxu0 0.0
        %795 = vmatpush1.msra.mxu0 0.0
        %796 = vmatprep.subr.mxu0 0.0
        %797 = vmatpush1.msra.mxu0 0.0
        %798 = vmatprep.subr.mxu0 0.0
        %799 = vmatpush1.msra.mxu0 0.0
        %800 = vmatprep.subr.mxu0 0.0
        %801 = vmatpush1.msra.mxu0 0.0
        %802 = vmatprep.subr.mxu0 0.0
        %803 = vmatpush1.msra.mxu0 0.0
        %804 = vmatprep.subr.mxu0 0.0
        %805 = vmatpush1.msra.mxu0 0.0
        %806 = vmatprep.subr.mxu0 0.0
        %807 = vmatpush1.msra.mxu0 0.0
        %808 = vmatprep.subr.mxu0 0.0
        %809 = vmatpush1.msra.mxu0 0.0
        %810 = vmatprep.subr.mxu0 0.0
        %811 = vmatpush1.msra.mxu0 0.0
        %812 = vmatprep.subr.mxu0 0.0
        %813 = vmatpush1.msra.mxu0 0.0
        %814 = vmatprep.subr.mxu0 0.0
        %815 = vmatpush1.msra.mxu0 0.0
        %816 = vmatprep.subr.mxu0 0.0
        %817 = vmatpush1.msra.mxu0 0.0
        %818 = vmatprep.subr.mxu0 0.0
        %819 = vmatpush1.msra.mxu0 0.0
        %820 = vmatprep.subr.mxu0 0.0
        %821 = vmatpush1.msra.mxu0 0.0
        %822 = vmatprep.subr.mxu0 0.0
        %823 = vmatpush1.msra.mxu0 0.0
        %824 = vmatprep.subr.mxu0 0.0
        %825 = vmatpush1.msra.mxu0 0.0
        %826 = vmatprep.subr.mxu0 0.0
        %827 = vmatpush1.msra.mxu0 0.0
        %828 = vmatprep.mubr.f32.mxu0 0.0
        %829 = vmatmul.mubr.f32.gmra.mrb[0].mxu0 %v762
        %v830 = vpop.f32.mrb[0].mxu0
        %v831 = vadd.f32 0.0, %v830
        %v832 = vpop.f32.mrb[0].mxu0
        %833 = vdwg.mxu0
        %v834 = vrcp.pop %v757
        %v835 = vmul.f32 %v831, %v834
        %s836 = scalar_lea.vmem [#allocation8], 24
        %v837 = vld [vmem:[%s836] sm:$0xff]
        %838 = vrot.lane.b32.xlu0 %v333, 104
        %v839 = vpop.permute.xlu0 %838
        %840 = vrot.lane.b32.xlu0 %v333, 72
        %v841 = vpop.permute.xlu0 %840
        %v842 = vsel %vm340, %v839, 0
        %v844 = vsel %vm340, %v841, 0
        %846 = vmatprep.subr.mxu0 0.0
        %847 = vmatpush1.xpose.msra.mxu0 %v844
        %848 = vmatprep.subr.mxu0 0.0
        %849 = vmatpush1.xpose.msra.mxu0 0.0
        %850 = vmatprep.subr.mxu0 0.0
        %851 = vmatpush1.xpose.msra.mxu0 0.0
        %852 = vmatprep.subr.mxu0 0.0
        %853 = vmatpush1.xpose.msra.mxu0 0.0
        %854 = vmatprep.subr.mxu0 0.0
        %855 = vmatpush1.xpose.msra.mxu0 0.0
        %856 = vmatprep.subr.mxu0 0.0
        %857 = vmatpush1.xpose.msra.mxu0 0.0
        %858 = vmatprep.subr.mxu0 0.0
        %859 = vmatpush1.xpose.msra.mxu0 0.0
        %860 = vmatprep.subr.mxu0 0.0
        %861 = vmatpush1.xpose.msra.mxu0 0.0
        %862 = vmatprep.subr.mxu0 0.0
        %863 = vmatpush1.xpose.msra.mxu0 0.0
        %864 = vmatprep.subr.mxu0 0.0
        %865 = vmatpush1.xpose.msra.mxu0 0.0
        %866 = vmatprep.subr.mxu0 0.0
        %867 = vmatpush1.xpose.msra.mxu0 0.0
        %868 = vmatprep.subr.mxu0 0.0
        %869 = vmatpush1.xpose.msra.mxu0 0.0
        %870 = vmatprep.subr.mxu0 0.0
        %871 = vmatpush1.xpose.msra.mxu0 0.0
        %872 = vmatprep.subr.mxu0 0.0
        %873 = vmatpush1.xpose.msra.mxu0 0.0
        %874 = vmatprep.subr.mxu0 0.0
        %875 = vmatpush1.xpose.msra.mxu0 0.0
        %876 = vmatprep.subr.mxu0 0.0
        %877 = vmatpush1.xpose.msra.mxu0 0.0
        %878 = vmatprep.subr.mxu0 0.0
        %879 = vmatpush1.xpose.msra.mxu0 0.0
        %880 = vmatprep.subr.mxu0 0.0
        %881 = vmatpush1.xpose.msra.mxu0 0.0
        %882 = vmatprep.subr.mxu0 0.0
        %883 = vmatpush1.xpose.msra.mxu0 0.0
        %884 = vmatprep.subr.mxu0 0.0
        %885 = vmatpush1.xpose.msra.mxu0 0.0
        %886 = vmatprep.subr.mxu0 0.0
        %887 = vmatpush1.xpose.msra.mxu0 0.0
        %888 = vmatprep.subr.mxu0 0.0
        %889 = vmatpush1.xpose.msra.mxu0 0.0
        %890 = vmatprep.subr.mxu0 0.0
        %891 = vmatpush1.xpose.msra.mxu0 0.0
        %892 = vmatprep.subr.mxu0 0.0
        %893 = vmatpush1.xpose.msra.mxu0 0.0
        %894 = vmatprep.subr.mxu0 0.0
        %895 = vmatpush1.xpose.msra.mxu0 0.0
        %896 = vmatprep.subr.mxu0 0.0
        %897 = vmatpush1.xpose.msra.mxu0 0.0
        %898 = vmatprep.subr.mxu0 0.0
        %899 = vmatpush1.xpose.msra.mxu0 0.0
        %900 = vmatprep.subr.mxu0 0.0
        %901 = vmatpush1.xpose.msra.mxu0 0.0
        %902 = vmatprep.subr.mxu0 0.0
        %903 = vmatpush1.xpose.msra.mxu0 0.0
        %904 = vmatprep.subr.mxu0 0.0
        %905 = vmatpush1.xpose.msra.mxu0 0.0
        %906 = vmatprep.subr.mxu0 0.0
        %907 = vmatpush1.xpose.msra.mxu0 0.0
        %908 = vmatprep.subr.mxu0 0.0
        %909 = vmatpush1.xpose.msra.mxu0 0.0
        %910 = vmatprep.mubr.f32.mxu0 0.0
        %911 = vmatmul.mubr.f32.gmra.mrb[0].mxu0 %v842
        %v912 = vpop.f32.mrb[0].mxu0
        %v913 = vadd.f32 %v837, %v912
        %v914 = vpop.f32.mrb[0].mxu0
        %915 = vdwg.mxu0
        %v916 = vsel %vm340, %v913, -inf
        %917 = vmax.xlane.f32.xlu0 %v916
        %v918 = vpop.xlane.xlu0 %917
        %v919 = vsub.f32 %v913, %v918
        %v920 = vmul.f32 %v919, 1.442695
        %v921 = vpow.pop %v920
        %v922 = vsel %vm340, %v921, 0.0
        %923 = vadd.xlane.f32.xlu0 %v922
        %v924 = vpop.xlane.xlu0 %923
        %925 = vrot.lane.b32.xlu0 %v333, 40
        %v926 = vpop.permute.xlu0 %925
        %v929 = vsel %vm340, %v921, 0
        %931 = vmatprep.subr.mxu0 0.0
        %932 = vmatpush1.msra.mxu0 %v926
        %933 = vmatprep.subr.mxu0 0.0
        %934 = vmatpush1.msra.mxu0 0.0
        %935 = vmatprep.subr.mxu0 0.0
        %936 = vmatpush1.msra.mxu0 0.0
        %937 = vmatprep.subr.mxu0 0.0
        %938 = vmatpush1.msra.mxu0 0.0
        %939 = vmatprep.subr.mxu0 0.0
        %940 = vmatpush1.msra.mxu0 0.0
        %941 = vmatprep.subr.mxu0 0.0
        %942 = vmatpush1.msra.mxu0 0.0
        %943 = vmatprep.subr.mxu0 0.0
        %944 = vmatpush1.msra.mxu0 0.0
        %945 = vmatprep.subr.mxu0 0.0
        %946 = vmatpush1.msra.mxu0 0.0
        %947 = vmatprep.subr.mxu0 0.0
        %948 = vmatpush1.msra.mxu0 0.0
        %949 = vmatprep.subr.mxu0 0.0
        %950 = vmatpush1.msra.mxu0 0.0
        %951 = vmatprep.subr.mxu0 0.0
        %952 = vmatpush1.msra.mxu0 0.0
        %953 = vmatprep.subr.mxu0 0.0
        %954 = vmatpush1.msra.mxu0 0.0
        %955 = vmatprep.subr.mxu0 0.0
        %956 = vmatpush1.msra.mxu0 0.0
        %957 = vmatprep.subr.mxu0 0.0
        %958 = vmatpush1.msra.mxu0 0.0
        %959 = vmatprep.subr.mxu0 0.0
        %960 = vmatpush1.msra.mxu0 0.0
        %961 = vmatprep.subr.mxu0 0.0
        %962 = vmatpush1.msra.mxu0 0.0
        %963 = vmatprep.subr.mxu0 0.0
        %964 = vmatpush1.msra.mxu0 0.0
        %965 = vmatprep.subr.mxu0 0.0
        %966 = vmatpush1.msra.mxu0 0.0
        %967 = vmatprep.subr.mxu0 0.0
        %968 = vmatpush1.msra.mxu0 0.0
        %969 = vmatprep.subr.mxu0 0.0
        %970 = vmatpush1.msra.mxu0 0.0
        %971 = vmatprep.subr.mxu0 0.0
        %972 = vmatpush1.msra.mxu0 0.0
        %973 = vmatprep.subr.mxu0 0.0
        %974 = vmatpush1.msra.mxu0 0.0
        %975 = vmatprep.subr.mxu0 0.0
        %976 = vmatpush1.msra.mxu0 0.0
        %977 = vmatprep.subr.mxu0 0.0
        %978 = vmatpush1.msra.mxu0 0.0
        %979 = vmatprep.subr.mxu0 0.0
        %980 = vmatpush1.msra.mxu0 0.0
        %981 = vmatprep.subr.mxu0 0.0
        %982 = vmatpush1.msra.mxu0 0.0
        %983 = vmatprep.subr.mxu0 0.0
        %984 = vmatpush1.msra.mxu0 0.0
        %985 = vmatprep.subr.mxu0 0.0
        %986 = vmatpush1.msra.mxu0 0.0
        %987 = vmatprep.subr.mxu0 0.0
        %988 = vmatpush1.msra.mxu0 0.0
        %989 = vmatprep.subr.mxu0 0.0
        %990 = vmatpush1.msra.mxu0 0.0
        %991 = vmatprep.subr.mxu0 0.0
        %992 = vmatpush1.msra.mxu0 0.0
        %993 = vmatprep.subr.mxu0 0.0
        %994 = vmatpush1.msra.mxu0 0.0
        %995 = vmatprep.mubr.f32.mxu0 0.0
        %996 = vmatmul.mubr.f32.gmra.mrb[0].mxu0 %v929
        %v997 = vpop.f32.mrb[0].mxu0
        %v998 = vadd.f32 0.0, %v997
        %v999 = vpop.f32.mrb[0].mxu0
        %1000 = vdwg.mxu0
        %v1001 = vrcp.pop %v924
        %v1002 = vmul.f32 %v998, %v1001
        %1004 = vrot.lane.b32.xlu0 %v668, 8
        %v1005 = vpop.permute.xlu0 %1004
        %1008 = vrot.lane.b32.xlu0 %v835, 16
        %v1009 = vpop.permute.xlu0 %1008
        %1012 = vrot.lane.b32.xlu0 %v1002, 24
        %v1013 = vpop.permute.xlu0 %1012
        %v1015 = vsel %vm340, %v501, %v1005
        %vm1016 = vcmask 130048
        %v1017 = vsel %vm1016, %v1015, %v1009
        %vm1018 = vcmask 195584
        %v1019 = vsel %vm1018, %v1017, %v1013
        %v1020 = vld [vmem:[#allocation7] sm:$0xff]
        %v1021 = vld [vmem:[#allocation7 + $0x8] sm:$0xff]
        %v1022 = vld [vmem:[#allocation7 + $0x10] sm:$0xff]
        %v1023 = vld [vmem:[#allocation7 + $0x18] sm:$0xff]
        %v1025 = vsel %vm262, %v1019, 0
        %1027 = vmatprep.subr.mxu0 0.0
        %1028 = vmatpush1.msra.mxu0 %v1020
        %1029 = vmatprep.subr.mxu0 0.0
        %1030 = vmatpush1.msra.mxu0 %v1021
        %1031 = vmatprep.subr.mxu0 0.0
        %1032 = vmatpush1.msra.mxu0 %v1022
        %1033 = vmatprep.subr.mxu0 0.0
        %1034 = vmatpush1.msra.mxu0 %v1023
        %1035 = vmatprep.subr.mxu0 0.0
        %1036 = vmatpush1.msra.mxu0 0.0
        %1037 = vmatprep.subr.mxu0 0.0
        %1038 = vmatpush1.msra.mxu0 0.0
        %1039 = vmatprep.subr.mxu0 0.0
        %1040 = vmatpush1.msra.mxu0 0.0
        %1041 = vmatprep.subr.mxu0 0.0
        %1042 = vmatpush1.msra.mxu0 0.0
        %1043 = vmatprep.subr.mxu0 0.0
        %1044 = vmatpush1.msra.mxu0 0.0
        %1045 = vmatprep.subr.mxu0 0.0
        %1046 = vmatpush1.msra.mxu0 0.0
        %1047 = vmatprep.subr.mxu0 0.0
        %1048 = vmatpush1.msra.mxu0 0.0
        %1049 = vmatprep.subr.mxu0 0.0
        %1050 = vmatpush1.msra.mxu0 0.0
        %1051 = vmatprep.subr.mxu0 0.0
        %1052 = vmatpush1.msra.mxu0 0.0
        %1053 = vmatprep.subr.mxu0 0.0
        %1054 = vmatpush1.msra.mxu0 0.0
        %1055 = vmatprep.subr.mxu0 0.0
        %1056 = vmatpush1.msra.mxu0 0.0
        %1057 = vmatprep.subr.mxu0 0.0
        %1058 = vmatpush1.msra.mxu0 0.0
        %1059 = vmatprep.subr.mxu0 0.0
        %1060 = vmatpush1.msra.mxu0 0.0
        %1061 = vmatprep.subr.mxu0 0.0
        %1062 = vmatpush1.msra.mxu0 0.0
        %1063 = vmatprep.subr.mxu0 0.0
        %1064 = vmatpush1.msra.mxu0 0.0
        %1065 = vmatprep.subr.mxu0 0.0
        %1066 = vmatpush1.msra.mxu0 0.0
        %1067 = vmatprep.subr.mxu0 0.0
        %1068 = vmatpush1.msra.mxu0 0.0
        %1069 = vmatprep.subr.mxu0 0.0
        %1070 = vmatpush1.msra.mxu0 0.0
        %1071 = vmatprep.subr.mxu0 0.0
        %1072 = vmatpush1.msra.mxu0 0.0
        %1073 = vmatprep.subr.mxu0 0.0
        %1074 = vmatpush1.msra.mxu0 0.0
        %1075 = vmatprep.subr.mxu0 0.0
        %1076 = vmatpush1.msra.mxu0 0.0
        %1077 = vmatprep.subr.mxu0 0.0
        %1078 = vmatpush1.msra.mxu0 0.0
        %1079 = vmatprep.subr.mxu0 0.0
        %1080 = vmatpush1.msra.mxu0 0.0
        %1081 = vmatprep.subr.mxu0 0.0
        %1082 = vmatpush1.msra.mxu0 0.0
        %1083 = vmatprep.subr.mxu0 0.0
        %1084 = vmatpush1.msra.mxu0 0.0
        %1085 = vmatprep.subr.mxu0 0.0
        %1086 = vmatpush1.msra.mxu0 0.0
        %1087 = vmatprep.subr.mxu0 0.0
        %1088 = vmatpush1.msra.mxu0 0.0
        %1089 = vmatprep.subr.mxu0 0.0
        %1090 = vmatpush1.msra.mxu0 0.0
        %1091 = vmatprep.mubr.f32.mxu0 0.0
        %1092 = vmatmul.mubr.f32.gmra.mrb[0].mxu0 %v1025
        %v1093 = vpop.f32.mrb[0].mxu0
        %v1094 = vadd.f32 0.0, %v1093
        %v1095 = vpop.f32.mrb[0].mxu0
        %1096 = vdwg.mxu0
        %1097 = vst.msk [vmem:[%s256] sm:$0xff] %vm262, %v1094
        %s1098 = sand.u32 %s120, 1
        %s1099 = scalar_lea.sflag [#allocation4], %s1098
        %s1100 = sand.u32 %s120, 1
        %s1101 = smul.addr %s1100, 8
        %s1102 = scalar_lea.vmem [#allocation10], %s1101
        // Predicated region
        $region53: #{tpu_custom_call.1} parent=35 // pred_check
          %p1103 = pneg %p130
        $region54: #{tpu_custom_call.1} parent=35 // pred_check_branch
          %1105 = sbr.rel (%p1103) target = $region56
        $region55: #{tpu_custom_call.1} parent=35 // pred_region
          %s1107 = ssub.s32 128, 128
          %1108 = vsyncadd %s1099, %s1107
          %s1109 = smul.addr %s23, 128
          %s1110 = scalar_lea.hbm %s4, %s1109
          %s1112 = sshll.u32 %s1102, 4
          %s1113 = int_to_ptr.vmem [resolvable:$true] %s1112
          %1115 = dma.vmem_to_hbm [thread:$0]  %s1113, 128, %s1110, %s1099
        $region56: #{tpu_custom_call.1} parent=35 // pred_fallthru
          _
      $region36: #{tpu_custom_call.1} parent=5 // pred_fallthru
        _
      %p1116 = scmp.le.s32.totalorder 2, %s18
      // Predicated region
      $region57: #{tpu_custom_call.1} parent=5 // pred_check
        %p1117 = pneg %p1116
      $region58: #{tpu_custom_call.1} parent=5 // pred_check_branch
        %1119 = sbr.rel (%p1117) target = $region60
      $region59: #{tpu_custom_call.1} parent=5 // pred_region
        %s1120 = ssub.s32 %s18, 2
        // Predicated region
        $region61: #{tpu_custom_call.1} parent=59 // pred_check
          %p1121 = pneg %p136
        $region62: #{tpu_custom_call.1} parent=59 // pred_check_branch
          %1123 = sbr.rel (%p1121) target = $region64
        $region63: #{tpu_custom_call.1} parent=59 // pred_region
          %s1124 = sand.u32 %s121, 1
          %s1125 = scalar_lea.sflag [#allocation4], %s1124
          %s1126 = sand.u32 %s121, 1
          %s1127 = smul.addr %s1126, 8
          %s1128 = scalar_lea.vmem [#allocation10], %s1127
          %1129 = dma.done %s1125, 128
        $region64: #{tpu_custom_call.1} parent=59 // pred_fallthru
          _
      $region60: #{tpu_custom_call.1} parent=5 // pred_fallthru
        _
    $region6: #{tpu_custom_call.1} parent=1 // loop_footer
      %s22 = sadd.s32 1, %s18
    $region7: #{tpu_custom_call.1} parent=1 // loop_footer_branch
      %17 = sbr.rel target = $region3
    $region8: #{tpu_custom_call.1} parent=1 // loop_exit
      _
    %1130 = vsyncpa [#allocation3], 1
    %s1131 = scalar_lea.sflag [#allocation3], 1
    %1132 = vsyncpa %s1131, 1
    %1133 = vsyncpa [#allocation6], 1
    %1134 = vsyncpa [#allocation9], 1
    %1135 = vsyncpa [#allocation4], 1
    %s1136 = scalar_lea.sflag [#allocation4], 1
    %1137 = vsyncpa %s1136, 1

</llo_original>
